<compile_context>
chip_gen: v7x
topology: tpu7x:2x2x1
jax: 0.10.0
libtpu: 0.0.40
codegen_flags: <defaults>
</compile_context>

<pallas_src>
import functools

import jax
import jax.numpy as jnp
from jax.experimental import pallas as pl
from jax.experimental.pallas import tpu as pltpu


def _variable_node_kernel(x_ref, o_ref, *, lane_idx):
    # x_ref block: (tile_rows, lane_block) slab of the batch containing the
    # requested variable column.  lane_idx is a static Python int, so this is
    # a static single-lane slice: one cheap view load + store per vreg row
    # group, no VPU select / XLU reduce.
    o_ref[...] = x_ref[:, lane_idx:lane_idx + 1]


def _round_up(x: int, m: int) -> int:
    return ((x + m - 1) // m) * m


def variable_node_forward(batch: jax.Array, variable_index: int,
                          *, max_tile_rows: int = 8192) -> jax.Array:
    """VariableNode.forward: returns batch[:, variable_index] via a Pallas kernel."""
    N, D = batch.shape
    assert 0 <= variable_index < D, "variable_index out of range"

    # Lane-dense input slab: the 128-wide column block that holds the column
    # (or the full D when D < 128).  Static block/lane indices.
    lane_block = 128 if D >= 128 else D
    col_blk = variable_index // lane_block   # static block index along columns
    lane_idx = variable_index % lane_block   # static lane within the slab

    # Row tiling:
    #   * small N  -> single block covering the whole array (layout-legal even
    #     when N is not a multiple of 8, since block == full dim),
    #   * larger N -> at least two multiple-of-8 row blocks (lets the
    #     "parallel" grid axis shard across both v7x TensorCores), capped at
    #     max_tile_rows (4 MiB f32 per 128-lane block) to amortize the
    #     ~0.35 us per-grid-step overhead.
    if N <= 1024:
        tile_rows = N
    else:
        tile_rows = min(max_tile_rows, _round_up(pl.cdiv(N, 2), 8))
    grid = (pl.cdiv(N, tile_rows),)

    itemsize = jnp.dtype(batch.dtype).itemsize
    in_block_bytes = tile_rows * lane_block * itemsize
    out_block_bytes = tile_rows * itemsize
    # 2x (double-buffered) input + output blocks + slack for internal scratch;
    # never request more than 32 MiB (v7x has only 64 MiB physical per TC).
    vmem_limit = min(32 * 1024 * 1024,
                     2 * (in_block_bytes + out_block_bytes) + 8 * 1024 * 1024)

    kernel = functools.partial(_variable_node_kernel, lane_idx=lane_idx)

    out_2d = pl.pallas_call(
        kernel,
        out_shape=jax.ShapeDtypeStruct((N, 1), batch.dtype),
        grid_spec=pltpu.PrefetchScalarGridSpec(
            num_scalar_prefetch=0,
            grid=grid,
            # Only DMA the column slab that holds `variable_index`.
            in_specs=[pl.BlockSpec((tile_rows, lane_block),
                                   lambda i: (i, col_blk))],
            out_specs=pl.BlockSpec((tile_rows, 1), lambda i: (i, 0)),
        ),
        compiler_params=pltpu.CompilerParams(
            dimension_semantics=("parallel",),
            vmem_limit_bytes=vmem_limit,
        ),
        cost_estimate=pl.CostEstimate(
            flops=0,                    # pure data movement
            transcendentals=0,
            bytes_accessed=N * lane_block * itemsize + N * itemsize,
        ),
    )(batch)
    # Module returns a 1-D tensor of shape (num_samples,); reshape is metadata.
    return out_2d.reshape(N)


if __name__ == "__main__":
    key = jax.random.PRNGKey(0)
    # Small, forward-consistent shape: batch of 8 samples, 32 variables.
    batch = jax.random.normal(key, (8, 32), dtype=jnp.float32)
    variable_index = 5

    out = variable_node_forward(batch, variable_index)
    out = jax.block_until_ready(out)

    # Reference check against plain JAX (== torch `batch[:, variable_index]`).
    ref = batch[:, variable_index]
    assert out.shape == ref.shape and out.dtype == ref.dtype
    assert jnp.allclose(out, ref, atol=0.0, rtol=0.0)

    # Also exercise the multi-block path (ragged N, D wider than one lane
    # block, grid split across >= 2 row blocks).
    key2 = jax.random.PRNGKey(1)
    big = jax.random.normal(key2, (5000, 300), dtype=jnp.float32)
    out_big = jax.block_until_ready(variable_node_forward(big, 261))
    assert jnp.allclose(out_big, big[:, 261], atol=0.0, rtol=0.0)

    # And the large-N tiled path (multiple 8192-row tiles, ragged tail).
    key3 = jax.random.PRNGKey(2)
    huge = jax.random.normal(key3, (20000, 160), dtype=jnp.float32)
    out_huge = jax.block_until_ready(variable_node_forward(huge, 131))
    assert jnp.allclose(out_huge, huge[:, 131], atol=0.0, rtol=0.0)

    print("KERNEL_OK")
</pallas_src>

<mosaic_0001>
module attributes {stable_mosaic.version = 11 : i64} {
  func.func @_variable_node_kernel(%arg0: i32, %arg1: memref<8x32xf32, #tpu.memory_space<vmem>>, %arg2: memref<8x1xf32, #tpu.memory_space<vmem>>) attributes {dimension_semantics = [#tpu.dimension_semantics<parallel>], iteration_bounds = array<i64: 1>, scalar_prefetch = 0 : i64, scratch_operands = 0 : i64, tpu.core_type = #tpu.core_type<tc>, window_params = [{transform_indices = @transform_0, window_bounds = array<i64: 8, 32>}, {transform_indices = @transform_1, window_bounds = array<i64: 8, 1>}]} {
    %c0 = arith.constant 0 : index
    %c5 = arith.constant 5 : index
    %0 = vector.load %arg1[%c0, %c5] : memref<8x32xf32, #tpu.memory_space<vmem>>, vector<8x1xf32>
    %c0_0 = arith.constant 0 : index
    %c0_1 = arith.constant 0 : index
    %1 = vector.load %arg2[%c0_0, %c0_1] : memref<8x1xf32, #tpu.memory_space<vmem>>, vector<8x1xf32>
    tpu.vector_store %arg2[%c0_0, %c0_1], %0 {strides = array<i32>} : memref<8x1xf32, #tpu.memory_space<vmem>>, vector<8x1xf32>,
    return
  }
  func.func @transform_0(%arg0: i32) -> (i32, i32) {
    %c0_i32 = arith.constant 0 : i32
    %c0_i32_0 = arith.constant 0 : i32
    return %arg0, %c0_i32 : i32, i32
  }
  func.func @transform_1(%arg0: i32) -> (i32, i32) {
    %c0_i32 = arith.constant 0 : i32
    %c0_i32_0 = arith.constant 0 : i32
    return %arg0, %c0_i32 : i32, i32
  }
}

</mosaic_0001>

<llo_original>
// kernel: tpu_custom_call.1
$region0: #{tpu_custom_call.1}
  #allocation0 [shape = 'u32[]', space=smem, size = 0x4, offset = 0x4, fixed_abs, tag = 'smem constant byte address 0x4 - core index']
  #allocation1 [shape = 'u32[144,128]{1,0:T(1,128)}', space=vmem, size = 0x12000, scoped, tag = 'internal scratch']
  %s0 = inlined_call_operand.hbm [shape: f32[8,32], index: 0, kind: input, shape index: {}]
  %s1 = inlined_call_operand.vmem [shape: f32[8,1], index: 1, kind: output, shape index: {}]
  %s2 = sld [smem:[#allocation0]]
  $region18: #{tpu_custom_call.1} parent=0
    _
  %s4 = ssub.s32 1, %s2
  %s5 = scalar_select 0, %s4, %s2
  $region1: #{tpu_custom_call.1} parent=0
    #allocation2 [shape = 'u8[4096]{0}', space=vmem, size = 0x1000, scoped, tag = 'input window, operand 0, single buffered']
    #allocation3 [shape = 's32[1]{0}', space=sflag, size = 0x4, scoped, tag = 'scoped memory for tpu_custom_call.1']
    %6 = vsyncpa [#allocation3], 0
    // Predicated region
    $region2: #{tpu_custom_call.1} parent=1 // pred_check
      _
    $region3: #{tpu_custom_call.1} parent=1 // pred_check_branch
      %8 = sbr.rel (0) target = $region5
    $region4: #{tpu_custom_call.1} parent=1 // pred_region
      %s10 = ssub.s32 128, 128
      %11 = vsyncadd [#allocation3], %s10
      %s13 = sshll.u32 [#allocation2], 4
      %s14 = int_to_ptr.vmem [resolvable:$true] %s13
      %16 = dma.hbm_to_vmem [thread:$0]  %s0, 128, %s14, [#allocation3]
    $region5: #{tpu_custom_call.1} parent=1 // pred_fallthru
      _
    // Predicated region
    $region6: #{tpu_custom_call.1} parent=1 // pred_check
      _
    $region7: #{tpu_custom_call.1} parent=1 // pred_check_branch
      %18 = sbr.rel (0) target = $region9
    $region8: #{tpu_custom_call.1} parent=1 // pred_region
      %19 = dma.done [#allocation3], 128
    $region9: #{tpu_custom_call.1} parent=1 // pred_fallthru
      _
    %v20 = vld [vmem:[#allocation2] sm:$0xff]
    %22 = vrot.lane.b32.xlu0 %v20, 123
    %v23 = vpop.permute.xlu0 %22
    %vm25 = vcmask 7168
    %26 = vst.msk [vmem:[%s1] sm:$0xff] %vm25, %v23
    // Predicated region
    $region10: #{tpu_custom_call.1} parent=1 // pred_check
      _
    $region11: #{tpu_custom_call.1} parent=1 // pred_check_branch
      %28 = sbr.rel (0) target = $region13
    $region12: #{tpu_custom_call.1} parent=1 // pred_region
      _
    $region13: #{tpu_custom_call.1} parent=1 // pred_fallthru
      _
    // Predicated region
    $region14: #{tpu_custom_call.1} parent=1 // pred_check
      _
    $region15: #{tpu_custom_call.1} parent=1 // pred_check_branch
      %30 = sbr.rel (0) target = $region17
    $region16: #{tpu_custom_call.1} parent=1 // pred_region
      _
    $region17: #{tpu_custom_call.1} parent=1 // pred_fallthru
      _
    %31 = vsyncpa [#allocation3], 1

</llo_original>
